<compile_context>
chip_gen: v5e
topology: v5e:2x2
jax: 0.10.0
libtpu: 0.0.40
codegen_flags: <defaults>
</compile_context>

<pallas_src>
import functools

import jax
import jax.numpy as jnp
from jax.experimental import pallas as pl
from jax.experimental.pallas import tpu as pltpu


# ----------------------------- Pallas kernel ------------------------------ #

def _lstm_recurrence_kernel(xp_ref, whh_ref, hout_ref, h_sc, c_sc,
                            *, hidden, t_chunk):
    """Recurrent LSTM core.

    xp_ref : (t_chunk, Bt, 4H) precomputed x @ W_ih + b, gate order [i,f,o,g]
    whh_ref: (H, 4H)           recurrent weights (possibly bf16)
    hout_ref: (Bt, H)          final hidden state (written on last time chunk)
    h_sc/c_sc: (Bt, H) f32     state carried across time chunks
    """
    t_blk = pl.program_id(1)

    @pl.when(t_blk == 0)
    def _():
        h_sc[...] = jnp.zeros_like(h_sc)
        c_sc[...] = jnp.zeros_like(c_sc)

    H = hidden
    w_hh = whh_ref[...]  # loaded once per time chunk, resident for the loop

    def step(t, carry):
        h, c = carry
        # Dynamic index along the (untiled) leading time axis of the chunk.
        x_t = xp_ref[t].astype(jnp.float32)                      # (Bt, 4H)
        gates = x_t + jnp.dot(h.astype(w_hh.dtype), w_hh,
                              preferred_element_type=jnp.float32)
        # Gates were permuted to [i, f, o, g]: one contiguous sigmoid slab,
        # one contiguous tanh slab; all slices are lane-aligned (H % 128 == 0).
        sig = jax.nn.sigmoid(gates[:, 0:3 * H])
        i_g = sig[:, 0 * H:1 * H]
        f_g = sig[:, 1 * H:2 * H]
        o_g = sig[:, 2 * H:3 * H]
        g_g = jnp.tanh(gates[:, 3 * H:4 * H])
        c = f_g * c + i_g * g_g
        h = o_g * jnp.tanh(c)
        return h, c

    unroll = True if t_chunk <= 16 else 8
    h, c = jax.lax.fori_loop(0, t_chunk, step, (h_sc[...], c_sc[...]),
                             unroll=unroll)
    h_sc[...] = h
    c_sc[...] = c

    @pl.when(t_blk == pl.num_programs(1) - 1)
    def _():
        hout_ref[...] = h


# ------------------------------ host wrapper ------------------------------ #

def _largest_divisor(n, max_val):
    for d in range(min(n, max_val), 0, -1):
        if n % d == 0:
            return d
    return 1


def _reorder_ifgo_to_ifog(w, H):
    """Permute packed gate columns from PyTorch [i,f,g,o] to [i,f,o,g]."""
    return jnp.concatenate(
        [w[..., 0:2 * H], w[..., 3 * H:4 * H], w[..., 2 * H:3 * H]], axis=-1)


def _pad_gate_cols(w, H, H_pad):
    """Zero-pad each of the 4 gate blocks from width H to H_pad."""
    if H_pad == H:
        return w
    pads = [(0, 0)] * (w.ndim - 1) + [(0, H_pad - H)]
    parts = [jnp.pad(w[..., k * H:(k + 1) * H], pads) for k in range(4)]
    return jnp.concatenate(parts, axis=-1)


def lstm_regr_forward(x_ids, params, lengths=None, *,
                      compute_dtype=jnp.float32,
                      max_time_chunk=128, max_batch_tile=256):
    """x_ids: (B, T) int32 token ids. `lengths` is unused (matches PyTorch
    forward, which ignores `l`). Returns (B, 1) float32."""
    del lengths
    emb = params["embedding"]          # (V, E)
    w_ih = params["w_ih"]              # (E, 4H)   PyTorch gate order [i,f,g,o]
    w_hh = params["w_hh"]              # (H, 4H)
    b = params["b"]                    # (1, 4H)   (b_ih + b_hh)
    w_lin = params["w_lin"]            # (H, 1)
    b_lin = params["b_lin"]            # (1, 1)

    B, T = x_ids.shape
    E = emb.shape[1]
    H = w_hh.shape[0]
    H_pad = ((H + 127) // 128) * 128   # lane-aligned gate width

    # One-time (trace-time) weight prep: gate permutation + lane padding.
    w_ih_k = _pad_gate_cols(_reorder_ifgo_to_ifog(w_ih, H), H, H_pad)   # (E, 4Hp)
    b_k = _pad_gate_cols(_reorder_ifgo_to_ifog(b, H), H, H_pad)         # (1, 4Hp)
    w_hh_k = _pad_gate_cols(_reorder_ifgo_to_ifog(w_hh, H), H, H_pad)   # (H, 4Hp)
    w_hh_k = jnp.pad(w_hh_k, ((0, H_pad - H), (0, 0)))                  # (Hp, 4Hp)
    w_hh_k = w_hh_k.astype(compute_dtype)

    # Glue: embedding lookup (dropout is eval-mode identity) + hoisted
    # time-parallel input projection with the bias folded in. Only the tiny
    # (B, T) id matrix is transposed so x_proj is produced time-major.
    # TODO(synk): training-mode dropout (p=0.2) not implemented; eval semantics.
    x_emb = jnp.take(emb, x_ids.T, axis=0).astype(jnp.float32)     # (T, B, E)
    x_proj = (x_emb.reshape(T * B, E) @ w_ih_k + b_k).reshape(T, B, 4 * H_pad)
    x_proj = x_proj.astype(compute_dtype)

    t_chunk = _largest_divisor(T, max_time_chunk)
    b_tile = _largest_divisor(B, max_batch_tile)
    if b_tile != B and b_tile % 8 != 0:    # respect the (8, 128) block rule
        b_tile = B

    kernel = functools.partial(_lstm_recurrence_kernel,
                               hidden=H_pad, t_chunk=t_chunk)

    h_final = pl.pallas_call(
        kernel,
        out_shape=jax.ShapeDtypeStruct((B, H_pad), jnp.float32),
        grid_spec=pltpu.PrefetchScalarGridSpec(
            num_scalar_prefetch=0,
            grid=(B // b_tile, T // t_chunk),
            in_specs=[
                # x_proj chunk: (Tc, Bt, 4Hp), time-major leading axis.
                pl.BlockSpec((t_chunk, b_tile, 4 * H_pad),
                             lambda bi, ti: (ti, bi, 0)),
                # Recurrent weights: constant block index (resident in VMEM).
                # TODO(synk): for very large H on v7x, add
                # pipeline_mode=pl.Buffered(1) here to drop double-buffering.
                pl.BlockSpec((H_pad, 4 * H_pad), lambda bi, ti: (0, 0)),
            ],
            out_specs=pl.BlockSpec((b_tile, H_pad), lambda bi, ti: (bi, 0)),
            scratch_shapes=[
                pltpu.VMEM((b_tile, H_pad), jnp.float32),  # h state
                pltpu.VMEM((b_tile, H_pad), jnp.float32),  # c state
            ],
        ),
        compiler_params=pltpu.CompilerParams(
            dimension_semantics=("parallel", "arbitrary"),
            vmem_limit_bytes=32 * 1024 * 1024,
        ),
    )(x_proj, w_hh_k)

    # Final (H, 1) linear stays in XLA: a lane-dense (B, H) kernel output plus
    # one tiny matmul is cheaper than a width-1 masked store in the kernel.
    return h_final[:, :H] @ w_lin + b_lin


# ------------------------------ pure-JAX ref ------------------------------ #

def lstm_regr_reference(x_ids, params):
    """Pure-JAX reference matching PyTorch LSTM semantics (eval mode)."""
    emb = params["embedding"]
    w_ih, w_hh, b = params["w_ih"], params["w_hh"], params["b"]
    w_lin, b_lin = params["w_lin"], params["b_lin"]
    H = w_hh.shape[0]
    B = x_ids.shape[0]
    x = jnp.take(emb, x_ids, axis=0).astype(jnp.float32)  # (B, T, E)

    def step(carry, x_t):
        h, c = carry
        gates = x_t @ w_ih + h @ w_hh + b[0]
        i = jax.nn.sigmoid(gates[:, 0 * H:1 * H])
        f = jax.nn.sigmoid(gates[:, 1 * H:2 * H])
        g = jnp.tanh(gates[:, 2 * H:3 * H])
        o = jax.nn.sigmoid(gates[:, 3 * H:4 * H])
        c = f * c + i * g
        h = o * jnp.tanh(c)
        return (h, c), None

    h0 = jnp.zeros((B, H), jnp.float32)
    c0 = jnp.zeros((B, H), jnp.float32)
    (h_final, _), _ = jax.lax.scan(step, (h0, c0), jnp.swapaxes(x, 0, 1))
    return h_final @ w_lin + b_lin


def init_params(key, vocab_size, embedding_dim, hidden_dim):
    k = jax.random.split(key, 6)
    s = 1.0 / jnp.sqrt(hidden_dim)
    emb = jax.random.normal(k[0], (vocab_size, embedding_dim), jnp.float32) * 0.1
    emb = emb.at[0].set(0.0)  # padding_idx=0 row is zero-initialized
    w_ih = jax.random.uniform(k[1], (embedding_dim, 4 * hidden_dim),
                              jnp.float32, -s, s)
    w_hh = jax.random.uniform(k[2], (hidden_dim, 4 * hidden_dim),
                              jnp.float32, -s, s)
    b = jax.random.uniform(k[3], (1, 4 * hidden_dim), jnp.float32, -s, s)
    w_lin = jax.random.uniform(k[4], (hidden_dim, 1), jnp.float32, -s, s)
    b_lin = jax.random.uniform(k[5], (1, 1), jnp.float32, -s, s)
    return {"embedding": emb, "w_ih": w_ih, "w_hh": w_hh, "b": b,
            "w_lin": w_lin, "b_lin": b_lin}


if __name__ == "__main__":
    vocab_size, embedding_dim, hidden_dim = 20, 16, 32
    B, T = 2, 8

    key = jax.random.PRNGKey(0)
    k_param, k_ids = jax.random.split(key)
    params = init_params(k_param, vocab_size, embedding_dim, hidden_dim)
    x_ids = jax.random.randint(k_ids, (B, T), 0, vocab_size, dtype=jnp.int32)

    ref = jax.block_until_ready(lstm_regr_reference(x_ids, params))

    # f32 path: strict parity with the PyTorch-semantics reference.
    out = jax.block_until_ready(lstm_regr_forward(x_ids, params))
    assert out.shape == (B, 1)
    assert jnp.allclose(out, ref, atol=1e-4, rtol=1e-4), (out, ref)

    # bf16 recurrent-matmul path (v6e/v7x MXU fast path): loose parity.
    out_bf16 = jax.block_until_ready(
        lstm_regr_forward(x_ids, params, compute_dtype=jnp.bfloat16))
    assert out_bf16.shape == (B, 1)
    assert jnp.allclose(out_bf16, ref, atol=5e-2, rtol=5e-2), (out_bf16, ref)

    print("KERNEL_OK")
</pallas_src>

<mosaic_0001>
module attributes {stable_mosaic.version = 11 : i64} {
  func.func @_lstm_recurrence_kernel(%arg0: i32, %arg1: i32, %arg2: memref<8x2x512xf32, #tpu.memory_space<vmem>>, %arg3: memref<128x512xf32, #tpu.memory_space<vmem>>, %arg4: memref<2x128xf32, #tpu.memory_space<vmem>>, %arg5: memref<2x128xf32, #tpu.memory_space<vmem>>, %arg6: memref<2x128xf32, #tpu.memory_space<vmem>>) attributes {dimension_semantics = [#tpu.dimension_semantics<parallel>, #tpu.dimension_semantics<arbitrary>], iteration_bounds = array<i64: 1, 1>, scalar_prefetch = 0 : i64, scratch_operands = 2 : i64, tpu.core_type = #tpu.core_type<tc>, window_params = [{transform_indices = @transform_0, window_bounds = array<i64: 8, 2, 512>}, {pipeline_mode = #tpu.pipeline_mode<synchronous>, transform_indices = @transform_1, window_bounds = array<i64: 128, 512>}, {transform_indices = @transform_2, window_bounds = array<i64: 2, 128>}]} {
    %c0_i32 = arith.constant 0 : i32
    %0 = arith.cmpi eq, %arg1, %c0_i32 : i32
    %1 = arith.extui %0 : i1 to i32
    %c0_i32_0 = arith.constant 0 : i32
    %2 = arith.cmpi ne, %1, %c0_i32_0 : i32
    scf.if %2 {
      %cst_44 = arith.constant 0.000000e+00 : f32
      %179 = vector.broadcast %cst_44 : f32 to vector<2x128xf32>
      %c0_45 = arith.constant 0 : index
      %c0_46 = arith.constant 0 : index
      %180 = vector.load %arg5[%c0_45, %c0_46] : memref<2x128xf32, #tpu.memory_space<vmem>>, vector<2x128xf32>
      tpu.vector_store %arg5[%c0_45, %c0_46], %179 {strides = array<i32>} : memref<2x128xf32, #tpu.memory_space<vmem>>, vector<2x128xf32>,
      %cst_47 = arith.constant 0.000000e+00 : f32
      %181 = vector.broadcast %cst_47 : f32 to vector<2x128xf32>
      %c0_48 = arith.constant 0 : index
      %c0_49 = arith.constant 0 : index
      %182 = vector.load %arg6[%c0_48, %c0_49] : memref<2x128xf32, #tpu.memory_space<vmem>>, vector<2x128xf32>
      tpu.vector_store %arg6[%c0_48, %c0_49], %181 {strides = array<i32>} : memref<2x128xf32, #tpu.memory_space<vmem>>, vector<2x128xf32>,
    } else {
    }
    %c0 = arith.constant 0 : index
    %c0_1 = arith.constant 0 : index
    %3 = vector.load %arg3[%c0, %c0_1] : memref<128x512xf32, #tpu.memory_space<vmem>>, vector<128x512xf32>
    %c0_2 = arith.constant 0 : index
    %c0_3 = arith.constant 0 : index
    %4 = vector.load %arg5[%c0_2, %c0_3] : memref<2x128xf32, #tpu.memory_space<vmem>>, vector<2x128xf32>
    %c0_4 = arith.constant 0 : index
    %c0_5 = arith.constant 0 : index
    %5 = vector.load %arg6[%c0_4, %c0_5] : memref<2x128xf32, #tpu.memory_space<vmem>>, vector<2x128xf32>
    %c0_i32_6 = arith.constant 0 : i32
    %6 = arith.index_cast %c0_i32_6 : i32 to index
    %c0_7 = arith.constant 0 : index
    %c0_8 = arith.constant 0 : index
    %7 = vector.load %arg2[%6, %c0_7, %c0_8] : memref<8x2x512xf32, #tpu.memory_space<vmem>>, vector<1x2x512xf32>
    %8 = vector.shape_cast %7 : vector<1x2x512xf32> to vector<2x512xf32>
    %cst = arith.constant dense<0.000000e+00> : vector<2x512xf32>
    %9 = tpu.matmul %4, %3, %cst {dimension_numbers = #tpu.dot_dimension_numbers<[1], [0], [0], [1], [0, 0, 1, 1], [], []>} : vector<2x128xf32>, vector<128x512xf32>, vector<2x512xf32> -> vector<2x512xf32>
    %10 = arith.addf %8, %9 : vector<2x512xf32>
    %11 = vector.extract_strided_slice %10 {offsets = [0, 0], sizes = [2, 384], strides = [1, 1]} : vector<2x512xf32> to vector<2x384xf32>
    %12 = arith.negf %11 : vector<2x384xf32>
    %13 = math.exp %12 : vector<2x384xf32>
    %cst_9 = arith.constant 1.000000e+00 : f32
    %14 = vector.broadcast %cst_9 : f32 to vector<2x384xf32>
    %15 = arith.addf %14, %13 : vector<2x384xf32>
    %16 = arith.divf %14, %15 : vector<2x384xf32>
    %17 = vector.extract_strided_slice %16 {offsets = [0, 0], sizes = [2, 128], strides = [1, 1]} : vector<2x384xf32> to vector<2x128xf32>
    %18 = vector.extract_strided_slice %16 {offsets = [0, 128], sizes = [2, 128], strides = [1, 1]} : vector<2x384xf32> to vector<2x128xf32>
    %19 = vector.extract_strided_slice %16 {offsets = [0, 256], sizes = [2, 128], strides = [1, 1]} : vector<2x384xf32> to vector<2x128xf32>
    %20 = vector.extract_strided_slice %10 {offsets = [0, 384], sizes = [2, 128], strides = [1, 1]} : vector<2x512xf32> to vector<2x128xf32>
    %21 = math.tanh %20 : vector<2x128xf32>
    %22 = arith.mulf %18, %5 : vector<2x128xf32>
    %23 = arith.mulf %17, %21 : vector<2x128xf32>
    %24 = arith.addf %22, %23 : vector<2x128xf32>
    %25 = math.tanh %24 : vector<2x128xf32>
    %26 = arith.mulf %19, %25 : vector<2x128xf32>
    %c1_i32 = arith.constant 1 : i32
    %27 = arith.index_cast %c1_i32 : i32 to index
    %c0_10 = arith.constant 0 : index
    %c0_11 = arith.constant 0 : index
    %28 = vector.load %arg2[%27, %c0_10, %c0_11] : memref<8x2x512xf32, #tpu.memory_space<vmem>>, vector<1x2x512xf32>
    %29 = vector.shape_cast %28 : vector<1x2x512xf32> to vector<2x512xf32>
    %cst_12 = arith.constant dense<0.000000e+00> : vector<2x512xf32>
    %30 = tpu.matmul %26, %3, %cst_12 {dimension_numbers = #tpu.dot_dimension_numbers<[1], [0], [0], [1], [0, 0, 1, 1], [], []>} : vector<2x128xf32>, vector<128x512xf32>, vector<2x512xf32> -> vector<2x512xf32>
    %31 = arith.addf %29, %30 : vector<2x512xf32>
    %32 = vector.extract_strided_slice %31 {offsets = [0, 0], sizes = [2, 384], strides = [1, 1]} : vector<2x512xf32> to vector<2x384xf32>
    %33 = arith.negf %32 : vector<2x384xf32>
    %34 = math.exp %33 : vector<2x384xf32>
    %cst_13 = arith.constant 1.000000e+00 : f32
    %35 = vector.broadcast %cst_13 : f32 to vector<2x384xf32>
    %36 = arith.addf %35, %34 : vector<2x384xf32>
    %37 = arith.divf %35, %36 : vector<2x384xf32>
    %38 = vector.extract_strided_slice %37 {offsets = [0, 0], sizes = [2, 128], strides = [1, 1]} : vector<2x384xf32> to vector<2x128xf32>
    %39 = vector.extract_strided_slice %37 {offsets = [0, 128], sizes = [2, 128], strides = [1, 1]} : vector<2x384xf32> to vector<2x128xf32>
    %40 = vector.extract_strided_slice %37 {offsets = [0, 256], sizes = [2, 128], strides = [1, 1]} : vector<2x384xf32> to vector<2x128xf32>
    %41 = vector.extract_strided_slice %31 {offsets = [0, 384], sizes = [2, 128], strides = [1, 1]} : vector<2x512xf32> to vector<2x128xf32>
    %42 = math.tanh %41 : vector<2x128xf32>
    %43 = arith.mulf %39, %24 : vector<2x128xf32>
    %44 = arith.mulf %38, %42 : vector<2x128xf32>
    %45 = arith.addf %43, %44 : vector<2x128xf32>
    %46 = math.tanh %45 : vector<2x128xf32>
    %47 = arith.mulf %40, %46 : vector<2x128xf32>
    %c2_i32 = arith.constant 2 : i32
    %48 = arith.index_cast %c2_i32 : i32 to index
    %c0_14 = arith.constant 0 : index
    %c0_15 = arith.constant 0 : index
    %49 = vector.load %arg2[%48, %c0_14, %c0_15] : memref<8x2x512xf32, #tpu.memory_space<vmem>>, vector<1x2x512xf32>
    %50 = vector.shape_cast %49 : vector<1x2x512xf32> to vector<2x512xf32>
    %cst_16 = arith.constant dense<0.000000e+00> : vector<2x512xf32>
    %51 = tpu.matmul %47, %3, %cst_16 {dimension_numbers = #tpu.dot_dimension_numbers<[1], [0], [0], [1], [0, 0, 1, 1], [], []>} : vector<2x128xf32>, vector<128x512xf32>, vector<2x512xf32> -> vector<2x512xf32>
    %52 = arith.addf %50, %51 : vector<2x512xf32>
    %53 = vector.extract_strided_slice %52 {offsets = [0, 0], sizes = [2, 384], strides = [1, 1]} : vector<2x512xf32> to vector<2x384xf32>
    %54 = arith.negf %53 : vector<2x384xf32>
    %55 = math.exp %54 : vector<2x384xf32>
    %cst_17 = arith.constant 1.000000e+00 : f32
    %56 = vector.broadcast %cst_17 : f32 to vector<2x384xf32>
    %57 = arith.addf %56, %55 : vector<2x384xf32>
    %58 = arith.divf %56, %57 : vector<2x384xf32>
    %59 = vector.extract_strided_slice %58 {offsets = [0, 0], sizes = [2, 128], strides = [1, 1]} : vector<2x384xf32> to vector<2x128xf32>
    %60 = vector.extract_strided_slice %58 {offsets = [0, 128], sizes = [2, 128], strides = [1, 1]} : vector<2x384xf32> to vector<2x128xf32>
    %61 = vector.extract_strided_slice %58 {offsets = [0, 256], sizes = [2, 128], strides = [1, 1]} : vector<2x384xf32> to vector<2x128xf32>
    %62 = vector.extract_strided_slice %52 {offsets = [0, 384], sizes = [2, 128], strides = [1, 1]} : vector<2x512xf32> to vector<2x128xf32>
    %63 = math.tanh %62 : vector<2x128xf32>
    %64 = arith.mulf %60, %45 : vector<2x128xf32>
    %65 = arith.mulf %59, %63 : vector<2x128xf32>
    %66 = arith.addf %64, %65 : vector<2x128xf32>
    %67 = math.tanh %66 : vector<2x128xf32>
    %68 = arith.mulf %61, %67 : vector<2x128xf32>
    %c3_i32 = arith.constant 3 : i32
    %69 = arith.index_cast %c3_i32 : i32 to index
    %c0_18 = arith.constant 0 : index
    %c0_19 = arith.constant 0 : index
    %70 = vector.load %arg2[%69, %c0_18, %c0_19] : memref<8x2x512xf32, #tpu.memory_space<vmem>>, vector<1x2x512xf32>
    %71 = vector.shape_cast %70 : vector<1x2x512xf32> to vector<2x512xf32>
    %cst_20 = arith.constant dense<0.000000e+00> : vector<2x512xf32>
    %72 = tpu.matmul %68, %3, %cst_20 {dimension_numbers = #tpu.dot_dimension_numbers<[1], [0], [0], [1], [0, 0, 1, 1], [], []>} : vector<2x128xf32>, vector<128x512xf32>, vector<2x512xf32> -> vector<2x512xf32>
    %73 = arith.addf %71, %72 : vector<2x512xf32>
    %74 = vector.extract_strided_slice %73 {offsets = [0, 0], sizes = [2, 384], strides = [1, 1]} : vector<2x512xf32> to vector<2x384xf32>
    %75 = arith.negf %74 : vector<2x384xf32>
    %76 = math.exp %75 : vector<2x384xf32>
    %cst_21 = arith.constant 1.000000e+00 : f32
    %77 = vector.broadcast %cst_21 : f32 to vector<2x384xf32>
    %78 = arith.addf %77, %76 : vector<2x384xf32>
    %79 = arith.divf %77, %78 : vector<2x384xf32>
    %80 = vector.extract_strided_slice %79 {offsets = [0, 0], sizes = [2, 128], strides = [1, 1]} : vector<2x384xf32> to vector<2x128xf32>
    %81 = vector.extract_strided_slice %79 {offsets = [0, 128], sizes = [2, 128], strides = [1, 1]} : vector<2x384xf32> to vector<2x128xf32>
    %82 = vector.extract_strided_slice %79 {offsets = [0, 256], sizes = [2, 128], strides = [1, 1]} : vector<2x384xf32> to vector<2x128xf32>
    %83 = vector.extract_strided_slice %73 {offsets = [0, 384], sizes = [2, 128], strides = [1, 1]} : vector<2x512xf32> to vector<2x128xf32>
    %84 = math.tanh %83 : vector<2x128xf32>
    %85 = arith.mulf %81, %66 : vector<2x128xf32>
    %86 = arith.mulf %80, %84 : vector<2x128xf32>
    %87 = arith.addf %85, %86 : vector<2x128xf32>
    %88 = math.tanh %87 : vector<2x128xf32>
    %89 = arith.mulf %82, %88 : vector<2x128xf32>
    %c4_i32 = arith.constant 4 : i32
    %90 = arith.index_cast %c4_i32 : i32 to index
    %c0_22 = arith.constant 0 : index
    %c0_23 = arith.constant 0 : index
    %91 = vector.load %arg2[%90, %c0_22, %c0_23] : memref<8x2x512xf32, #tpu.memory_space<vmem>>, vector<1x2x512xf32>
    %92 = vector.shape_cast %91 : vector<1x2x512xf32> to vector<2x512xf32>
    %cst_24 = arith.constant dense<0.000000e+00> : vector<2x512xf32>
    %93 = tpu.matmul %89, %3, %cst_24 {dimension_numbers = #tpu.dot_dimension_numbers<[1], [0], [0], [1], [0, 0, 1, 1], [], []>} : vector<2x128xf32>, vector<128x512xf32>, vector<2x512xf32> -> vector<2x512xf32>
    %94 = arith.addf %92, %93 : vector<2x512xf32>
    %95 = vector.extract_strided_slice %94 {offsets = [0, 0], sizes = [2, 384], strides = [1, 1]} : vector<2x512xf32> to vector<2x384xf32>
    %96 = arith.negf %95 : vector<2x384xf32>
    %97 = math.exp %96 : vector<2x384xf32>
    %cst_25 = arith.constant 1.000000e+00 : f32
    %98 = vector.broadcast %cst_25 : f32 to vector<2x384xf32>
    %99 = arith.addf %98, %97 : vector<2x384xf32>
    %100 = arith.divf %98, %99 : vector<2x384xf32>
    %101 = vector.extract_strided_slice %100 {offsets = [0, 0], sizes = [2, 128], strides = [1, 1]} : vector<2x384xf32> to vector<2x128xf32>
    %102 = vector.extract_strided_slice %100 {offsets = [0, 128], sizes = [2, 128], strides = [1, 1]} : vector<2x384xf32> to vector<2x128xf32>
    %103 = vector.extract_strided_slice %100 {offsets = [0, 256], sizes = [2, 128], strides = [1, 1]} : vector<2x384xf32> to vector<2x128xf32>
    %104 = vector.extract_strided_slice %94 {offsets = [0, 384], sizes = [2, 128], strides = [1, 1]} : vector<2x512xf32> to vector<2x128xf32>
    %105 = math.tanh %104 : vector<2x128xf32>
    %106 = arith.mulf %102, %87 : vector<2x128xf32>
    %107 = arith.mulf %101, %105 : vector<2x128xf32>
    %108 = arith.addf %106, %107 : vector<2x128xf32>
    %109 = math.tanh %108 : vector<2x128xf32>
    %110 = arith.mulf %103, %109 : vector<2x128xf32>
    %c5_i32 = arith.constant 5 : i32
    %111 = arith.index_cast %c5_i32 : i32 to index
    %c0_26 = arith.constant 0 : index
    %c0_27 = arith.constant 0 : index
    %112 = vector.load %arg2[%111, %c0_26, %c0_27] : memref<8x2x512xf32, #tpu.memory_space<vmem>>, vector<1x2x512xf32>
    %113 = vector.shape_cast %112 : vector<1x2x512xf32> to vector<2x512xf32>
    %cst_28 = arith.constant dense<0.000000e+00> : vector<2x512xf32>
    %114 = tpu.matmul %110, %3, %cst_28 {dimension_numbers = #tpu.dot_dimension_numbers<[1], [0], [0], [1], [0, 0, 1, 1], [], []>} : vector<2x128xf32>, vector<128x512xf32>, vector<2x512xf32> -> vector<2x512xf32>
    %115 = arith.addf %113, %114 : vector<2x512xf32>
    %116 = vector.extract_strided_slice %115 {offsets = [0, 0], sizes = [2, 384], strides = [1, 1]} : vector<2x512xf32> to vector<2x384xf32>
    %117 = arith.negf %116 : vector<2x384xf32>
    %118 = math.exp %117 : vector<2x384xf32>
    %cst_29 = arith.constant 1.000000e+00 : f32
    %119 = vector.broadcast %cst_29 : f32 to vector<2x384xf32>
    %120 = arith.addf %119, %118 : vector<2x384xf32>
    %121 = arith.divf %119, %120 : vector<2x384xf32>
    %122 = vector.extract_strided_slice %121 {offsets = [0, 0], sizes = [2, 128], strides = [1, 1]} : vector<2x384xf32> to vector<2x128xf32>
    %123 = vector.extract_strided_slice %121 {offsets = [0, 128], sizes = [2, 128], strides = [1, 1]} : vector<2x384xf32> to vector<2x128xf32>
    %124 = vector.extract_strided_slice %121 {offsets = [0, 256], sizes = [2, 128], strides = [1, 1]} : vector<2x384xf32> to vector<2x128xf32>
    %125 = vector.extract_strided_slice %115 {offsets = [0, 384], sizes = [2, 128], strides = [1, 1]} : vector<2x512xf32> to vector<2x128xf32>
    %126 = math.tanh %125 : vector<2x128xf32>
    %127 = arith.mulf %123, %108 : vector<2x128xf32>
    %128 = arith.mulf %122, %126 : vector<2x128xf32>
    %129 = arith.addf %127, %128 : vector<2x128xf32>
    %130 = math.tanh %129 : vector<2x128xf32>
    %131 = arith.mulf %124, %130 : vector<2x128xf32>
    %c6_i32 = arith.constant 6 : i32
    %132 = arith.index_cast %c6_i32 : i32 to index
    %c0_30 = arith.constant 0 : index
    %c0_31 = arith.constant 0 : index
    %133 = vector.load %arg2[%132, %c0_30, %c0_31] : memref<8x2x512xf32, #tpu.memory_space<vmem>>, vector<1x2x512xf32>
    %134 = vector.shape_cast %133 : vector<1x2x512xf32> to vector<2x512xf32>
    %cst_32 = arith.constant dense<0.000000e+00> : vector<2x512xf32>
    %135 = tpu.matmul %131, %3, %cst_32 {dimension_numbers = #tpu.dot_dimension_numbers<[1], [0], [0], [1], [0, 0, 1, 1], [], []>} : vector<2x128xf32>, vector<128x512xf32>, vector<2x512xf32> -> vector<2x512xf32>
    %136 = arith.addf %134, %135 : vector<2x512xf32>
    %137 = vector.extract_strided_slice %136 {offsets = [0, 0], sizes = [2, 384], strides = [1, 1]} : vector<2x512xf32> to vector<2x384xf32>
    %138 = arith.negf %137 : vector<2x384xf32>
    %139 = math.exp %138 : vector<2x384xf32>
    %cst_33 = arith.constant 1.000000e+00 : f32
    %140 = vector.broadcast %cst_33 : f32 to vector<2x384xf32>
    %141 = arith.addf %140, %139 : vector<2x384xf32>
    %142 = arith.divf %140, %141 : vector<2x384xf32>
    %143 = vector.extract_strided_slice %142 {offsets = [0, 0], sizes = [2, 128], strides = [1, 1]} : vector<2x384xf32> to vector<2x128xf32>
    %144 = vector.extract_strided_slice %142 {offsets = [0, 128], sizes = [2, 128], strides = [1, 1]} : vector<2x384xf32> to vector<2x128xf32>
    %145 = vector.extract_strided_slice %142 {offsets = [0, 256], sizes = [2, 128], strides = [1, 1]} : vector<2x384xf32> to vector<2x128xf32>
    %146 = vector.extract_strided_slice %136 {offsets = [0, 384], sizes = [2, 128], strides = [1, 1]} : vector<2x512xf32> to vector<2x128xf32>
    %147 = math.tanh %146 : vector<2x128xf32>
    %148 = arith.mulf %144, %129 : vector<2x128xf32>
    %149 = arith.mulf %143, %147 : vector<2x128xf32>
    %150 = arith.addf %148, %149 : vector<2x128xf32>
    %151 = math.tanh %150 : vector<2x128xf32>
    %152 = arith.mulf %145, %151 : vector<2x128xf32>
    %c7_i32 = arith.constant 7 : i32
    %153 = arith.index_cast %c7_i32 : i32 to index
    %c0_34 = arith.constant 0 : index
    %c0_35 = arith.constant 0 : index
    %154 = vector.load %arg2[%153, %c0_34, %c0_35] : memref<8x2x512xf32, #tpu.memory_space<vmem>>, vector<1x2x512xf32>
    %155 = vector.shape_cast %154 : vector<1x2x512xf32> to vector<2x512xf32>
    %cst_36 = arith.constant dense<0.000000e+00> : vector<2x512xf32>
    %156 = tpu.matmul %152, %3, %cst_36 {dimension_numbers = #tpu.dot_dimension_numbers<[1], [0], [0], [1], [0, 0, 1, 1], [], []>} : vector<2x128xf32>, vector<128x512xf32>, vector<2x512xf32> -> vector<2x512xf32>
    %157 = arith.addf %155, %156 : vector<2x512xf32>
    %158 = vector.extract_strided_slice %157 {offsets = [0, 0], sizes = [2, 384], strides = [1, 1]} : vector<2x512xf32> to vector<2x384xf32>
    %159 = arith.negf %158 : vector<2x384xf32>
    %160 = math.exp %159 : vector<2x384xf32>
    %cst_37 = arith.constant 1.000000e+00 : f32
    %161 = vector.broadcast %cst_37 : f32 to vector<2x384xf32>
    %162 = arith.addf %161, %160 : vector<2x384xf32>
    %163 = arith.divf %161, %162 : vector<2x384xf32>
    %164 = vector.extract_strided_slice %163 {offsets = [0, 0], sizes = [2, 128], strides = [1, 1]} : vector<2x384xf32> to vector<2x128xf32>
    %165 = vector.extract_strided_slice %163 {offsets = [0, 128], sizes = [2, 128], strides = [1, 1]} : vector<2x384xf32> to vector<2x128xf32>
    %166 = vector.extract_strided_slice %163 {offsets = [0, 256], sizes = [2, 128], strides = [1, 1]} : vector<2x384xf32> to vector<2x128xf32>
    %167 = vector.extract_strided_slice %157 {offsets = [0, 384], sizes = [2, 128], strides = [1, 1]} : vector<2x512xf32> to vector<2x128xf32>
    %168 = math.tanh %167 : vector<2x128xf32>
    %169 = arith.mulf %165, %150 : vector<2x128xf32>
    %170 = arith.mulf %164, %168 : vector<2x128xf32>
    %171 = arith.addf %169, %170 : vector<2x128xf32>
    %172 = math.tanh %171 : vector<2x128xf32>
    %173 = arith.mulf %166, %172 : vector<2x128xf32>
    %c8_i32 = arith.constant 8 : i32
    %c0_38 = arith.constant 0 : index
    %c0_39 = arith.constant 0 : index
    %174 = vector.load %arg5[%c0_38, %c0_39] : memref<2x128xf32, #tpu.memory_space<vmem>>, vector<2x128xf32>
    tpu.vector_store %arg5[%c0_38, %c0_39], %173 {strides = array<i32>} : memref<2x128xf32, #tpu.memory_space<vmem>>, vector<2x128xf32>,
    %c0_40 = arith.constant 0 : index
    %c0_41 = arith.constant 0 : index
    %175 = vector.load %arg6[%c0_40, %c0_41] : memref<2x128xf32, #tpu.memory_space<vmem>>, vector<2x128xf32>
    tpu.vector_store %arg6[%c0_40, %c0_41], %171 {strides = array<i32>} : memref<2x128xf32, #tpu.memory_space<vmem>>, vector<2x128xf32>,
    %c0_i32_42 = arith.constant 0 : i32
    %176 = arith.cmpi eq, %arg1, %c0_i32_42 : i32
    %177 = arith.extui %176 : i1 to i32
    %c0_i32_43 = arith.constant 0 : i32
    %178 = arith.cmpi ne, %177, %c0_i32_43 : i32
    scf.if %178 {
      %c0_44 = arith.constant 0 : index
      %c0_45 = arith.constant 0 : index
      %179 = vector.load %arg4[%c0_44, %c0_45] : memref<2x128xf32, #tpu.memory_space<vmem>>, vector<2x128xf32>
      tpu.vector_store %arg4[%c0_44, %c0_45], %173 {strides = array<i32>} : memref<2x128xf32, #tpu.memory_space<vmem>>, vector<2x128xf32>,
    } else {
    }
    return
  }
  func.func @transform_0(%arg0: i32, %arg1: i32) -> (i32, i32, i32) {
    %c0_i32 = arith.constant 0 : i32
    %c0_i32_0 = arith.constant 0 : i32
    return %arg1, %arg0, %c0_i32 : i32, i32, i32
  }
  func.func @transform_1(%arg0: i32, %arg1: i32) -> (i32, i32) {
    %c0_i32 = arith.constant 0 : i32
    %c0_i32_0 = arith.constant 0 : i32
    %c0_i32_1 = arith.constant 0 : i32
    return %c0_i32, %c0_i32_0 : i32, i32
  }
  func.func @transform_2(%arg0: i32, %arg1: i32) -> (i32, i32) {
    %c0_i32 = arith.constant 0 : i32
    %c0_i32_0 = arith.constant 0 : i32
    return %arg0, %c0_i32 : i32, i32
  }
}

</mosaic_0001>

<llo_original>
// kernel: tpu_custom_call.1
$region0: #{tpu_custom_call.1}
  #allocation0 [shape = 'u32[]', space=smem, size = 0x4, offset = 0x4, fixed_abs, tag = 'smem constant byte address 0x4 - core index']
  #allocation1 [shape = 'u32[72,128]{1,0:T(1,128)}', space=vmem, size = 0x9000, scoped, tag = 'internal scratch']
  #allocation2 [shape = 'f32[2,128]{1,0:T(2,128)}', space=vmem, size = 0x400, scoped, tag = 'scratch operand']
  #allocation3 [shape = 'f32[2,128]{1,0:T(2,128)}', space=vmem, size = 0x400, scoped, tag = 'scratch operand']
  %s0 = inlined_call_operand.hbm [shape: f32[8,2,512], index: 0, kind: input, shape index: {}]
  %s1 = inlined_call_operand.hbm [shape: f32[128,512], index: 1, kind: input, shape index: {}]
  %s2 = inlined_call_operand.hbm [shape: f32[2,128], index: 2, kind: output, shape index: {}]
  %s3 = sld [smem:[#allocation0]]
  $region34: #{tpu_custom_call.1} parent=0
    _
  %s5 = ssub.s32 1, %s3
  %s6 = scalar_select 0, %s5, %s3
  $region1: #{tpu_custom_call.1} parent=0
    #allocation4 [shape = 'u8[32768]{0}', space=vmem, size = 0x8000, scoped, tag = 'input window, operand 0, single buffered']
    #allocation5 [shape = 's32[1]{0}', space=sflag, size = 0x4, scoped, tag = 'scoped memory for tpu_custom_call.1']
    #allocation6 [shape = 's32[1]{0}', space=sflag, size = 0x4, scoped, tag = 'scoped memory for tpu_custom_call.1']
    #allocation7 [shape = 'u8[262144]{0}', space=vmem, size = 0x40000, scoped, tag = 'input window, operand 1, single buffered']
    #allocation8 [shape = 's32[1]{0}', space=sflag, size = 0x4, scoped, tag = 'scoped memory for tpu_custom_call.1']
    #allocation9 [shape = 'u8[1024]{0}', space=vmem, size = 0x400, scoped, tag = 'output window, operand 0, single buffered']
    %7 = vsyncpa [#allocation5], 0
    %8 = vsyncpa [#allocation8], 0
    %9 = vsyncpa [#allocation6], 0
    // Predicated region
    $region2: #{tpu_custom_call.1} parent=1 // pred_check
      _
    $region3: #{tpu_custom_call.1} parent=1 // pred_check_branch
      %11 = sbr.rel (0) target = $region5
    $region4: #{tpu_custom_call.1} parent=1 // pred_region
      %13 = vsyncadd [#allocation5], 0
      %s14 = sshll.u32 %s0, 4
      %s15 = int_to_ptr.hbm [resolvable:$true] %s14
      %s16 = sshll.u32 [#allocation4], 4
      %s17 = int_to_ptr.vmem [resolvable:$true] %s16
      %22 = dma.hbm_to_vmem [thread:$0]  %s15, 1024, %s17, [#allocation5], 128, 128, 8
    $region5: #{tpu_custom_call.1} parent=1 // pred_fallthru
      _
    // Predicated region
    $region6: #{tpu_custom_call.1} parent=1 // pred_check
      _
    $region7: #{tpu_custom_call.1} parent=1 // pred_check_branch
      %24 = sbr.rel (0) target = $region9
    $region8: #{tpu_custom_call.1} parent=1 // pred_region
      %26 = vsyncadd [#allocation8], 0
      %s27 = sshll.u32 %s1, 4
      %s28 = int_to_ptr.hbm [resolvable:$true] %s27
      %s29 = sshll.u32 [#allocation7], 4
      %s30 = int_to_ptr.vmem [resolvable:$true] %s29
      %35 = dma.hbm_to_vmem [thread:$0]  %s28, 8192, %s30, [#allocation8], 512, 512, 32
    $region9: #{tpu_custom_call.1} parent=1 // pred_fallthru
      _
    // Predicated region
    $region10: #{tpu_custom_call.1} parent=1 // pred_check
      _
    $region11: #{tpu_custom_call.1} parent=1 // pred_check_branch
      %37 = sbr.rel (0) target = $region13
    $region12: #{tpu_custom_call.1} parent=1 // pred_region
      %39 = dma.done [#allocation5], 1024
    $region13: #{tpu_custom_call.1} parent=1 // pred_fallthru
      _
    // Predicated region
    $region14: #{tpu_custom_call.1} parent=1 // pred_check
      _
    $region15: #{tpu_custom_call.1} parent=1 // pred_check_branch
      %41 = sbr.rel (0) target = $region17
    $region16: #{tpu_custom_call.1} parent=1 // pred_region
      %43 = dma.done [#allocation8], 8192
    $region17: #{tpu_custom_call.1} parent=1 // pred_fallthru
      _
    %p44 = scmp.eq.s32.totalorder 0, 0
    // Predicated region
    $region18: #{tpu_custom_call.1} parent=1 // pred_check
      %p45 = pneg %p44
    $region19: #{tpu_custom_call.1} parent=1 // pred_check_branch
      %47 = sbr.rel (%p45) target = $region21
    $region20: #{tpu_custom_call.1} parent=1 // pred_region
      %48 = vst [vmem:[#allocation2] sm:$0x3] 0.0
      %49 = vst [vmem:[#allocation3] sm:$0x3] 0.0
    $region21: #{tpu_custom_call.1} parent=1 // pred_fallthru
      _
    %v50 = vld [vmem:[#allocation7] sm:$0xff]
    %v51 = vld [vmem:[#allocation7 + $0x8] sm:$0xff]
    %v52 = vld [vmem:[#allocation7 + $0x10] sm:$0xff]
    %v53 = vld [vmem:[#allocation7 + $0x18] sm:$0xff]
    %v54 = vld [vmem:[#allocation7 + $0x20] sm:$0xff]
    %v55 = vld [vmem:[#allocation7 + $0x28] sm:$0xff]
    %v56 = vld [vmem:[#allocation7 + $0x30] sm:$0xff]
    %v57 = vld [vmem:[#allocation7 + $0x38] sm:$0xff]
    %v58 = vld [vmem:[#allocation7 + $0x40] sm:$0xff]
    %v59 = vld [vmem:[#allocation7 + $0x48] sm:$0xff]
    %v60 = vld [vmem:[#allocation7 + $0x50] sm:$0xff]
    %v61 = vld [vmem:[#allocation7 + $0x58] sm:$0xff]
    %v62 = vld [vmem:[#allocation7 + $0x60] sm:$0xff]
    %v63 = vld [vmem:[#allocation7 + $0x68] sm:$0xff]
    %v64 = vld [vmem:[#allocation7 + $0x70] sm:$0xff]
    %v65 = vld [vmem:[#allocation7 + $0x78] sm:$0xff]
    %v66 = vld [vmem:[#allocation7 + $0x80] sm:$0xff]
    %v67 = vld [vmem:[#allocation7 + $0x88] sm:$0xff]
    %v68 = vld [vmem:[#allocation7 + $0x90] sm:$0xff]
    %v69 = vld [vmem:[#allocation7 + $0x98] sm:$0xff]
    %v70 = vld [vmem:[#allocation7 + $0xa0] sm:$0xff]
    %v71 = vld [vmem:[#allocation7 + $0xa8] sm:$0xff]
    %v72 = vld [vmem:[#allocation7 + $0xb0] sm:$0xff]
    %v73 = vld [vmem:[#allocation7 + $0xb8] sm:$0xff]
    %v74 = vld [vmem:[#allocation7 + $0xc0] sm:$0xff]
    %v75 = vld [vmem:[#allocation7 + $0xc8] sm:$0xff]
    %v76 = vld [vmem:[#allocation7 + $0xd0] sm:$0xff]
    %v77 = vld [vmem:[#allocation7 + $0xd8] sm:$0xff]
    %v78 = vld [vmem:[#allocation7 + $0xe0] sm:$0xff]
    %v79 = vld [vmem:[#allocation7 + $0xe8] sm:$0xff]
    %v80 = vld [vmem:[#allocation7 + $0xf0] sm:$0xff]
    %v81 = vld [vmem:[#allocation7 + $0xf8] sm:$0xff]
    %v82 = vld [vmem:[#allocation7 + $0x100] sm:$0xff]
    %v83 = vld [vmem:[#allocation7 + $0x108] sm:$0xff]
    %v84 = vld [vmem:[#allocation7 + $0x110] sm:$0xff]
    %v85 = vld [vmem:[#allocation7 + $0x118] sm:$0xff]
    %v86 = vld [vmem:[#allocation7 + $0x120] sm:$0xff]
    %v87 = vld [vmem:[#allocation7 + $0x128] sm:$0xff]
    %v88 = vld [vmem:[#allocation7 + $0x130] sm:$0xff]
    %v89 = vld [vmem:[#allocation7 + $0x138] sm:$0xff]
    %v90 = vld [vmem:[#allocation7 + $0x140] sm:$0xff]
    %v91 = vld [vmem:[#allocation7 + $0x148] sm:$0xff]
    %v92 = vld [vmem:[#allocation7 + $0x150] sm:$0xff]
    %v93 = vld [vmem:[#allocation7 + $0x158] sm:$0xff]
    %v94 = vld [vmem:[#allocation7 + $0x160] sm:$0xff]
    %v95 = vld [vmem:[#allocation7 + $0x168] sm:$0xff]
    %v96 = vld [vmem:[#allocation7 + $0x170] sm:$0xff]
    %v97 = vld [vmem:[#allocation7 + $0x178] sm:$0xff]
    %v98 = vld [vmem:[#allocation7 + $0x180] sm:$0xff]
    %v99 = vld [vmem:[#allocation7 + $0x188] sm:$0xff]
    %v100 = vld [vmem:[#allocation7 + $0x190] sm:$0xff]
    %v101 = vld [vmem:[#allocation7 + $0x198] sm:$0xff]
    %v102 = vld [vmem:[#allocation7 + $0x1a0] sm:$0xff]
    %v103 = vld [vmem:[#allocation7 + $0x1a8] sm:$0xff]
    %v104 = vld [vmem:[#allocation7 + $0x1b0] sm:$0xff]
    %v105 = vld [vmem:[#allocation7 + $0x1b8] sm:$0xff]
    %v106 = vld [vmem:[#allocation7 + $0x1c0] sm:$0xff]
    %v107 = vld [vmem:[#allocation7 + $0x1c8] sm:$0xff]
    %v108 = vld [vmem:[#allocation7 + $0x1d0] sm:$0xff]
    %v109 = vld [vmem:[#allocation7 + $0x1d8] sm:$0xff]
    %v110 = vld [vmem:[#allocation7 + $0x1e0] sm:$0xff]
    %v111 = vld [vmem:[#allocation7 + $0x1e8] sm:$0xff]
    %v112 = vld [vmem:[#allocation7 + $0x1f0] sm:$0xff]
    %v113 = vld [vmem:[#allocation7 + $0x1f8] sm:$0xff]
    %v114 = vld [vmem:[#allocation2] sm:$0x3]
    %v115 = vld [vmem:[#allocation3] sm:$0x3]
    %v116 = vld [vmem:[#allocation4] sm:$0xff]
    %117 = vmatpush.msra.mxu0 %v110
    %118 = vmatpush.msra.mxu0 %v106
    %119 = vmatpush.msra.mxu0 %v102
    %120 = vmatpush.msra.mxu0 %v98
    %121 = vmatpush.msra.mxu0 %v94
    %122 = vmatpush.msra.mxu0 %v90
    %123 = vmatpush.msra.mxu0 %v86
    %124 = vmatpush.msra.mxu0 %v82
    %125 = vmatpush.msra.mxu0 %v78
    %126 = vmatpush.msra.mxu0 %v74
    %127 = vmatpush.msra.mxu0 %v70
    %128 = vmatpush.msra.mxu0 %v66
    %129 = vmatpush.msra.mxu0 %v62
    %130 = vmatpush.msra.mxu0 %v58
    %131 = vmatpush.msra.mxu0 %v54
    %132 = vmatpush.msra.mxu0 %v50
    %133 = vmatmul.f32.gmra.mxu0 %v114
    %v134 = vpop.f32.mrf.mxu0
    %v135 = vadd.f32 0.0, %v134
    %136 = vdwg.mxu0
    %137 = vmatpush.msra.mxu0 %v111
    %138 = vmatpush.msra.mxu0 %v107
    %139 = vmatpush.msra.mxu0 %v103
    %140 = vmatpush.msra.mxu0 %v99
    %141 = vmatpush.msra.mxu0 %v95
    %142 = vmatpush.msra.mxu0 %v91
    %143 = vmatpush.msra.mxu0 %v87
    %144 = vmatpush.msra.mxu0 %v83
    %145 = vmatpush.msra.mxu0 %v79
    %146 = vmatpush.msra.mxu0 %v75
    %147 = vmatpush.msra.mxu0 %v71
    %148 = vmatpush.msra.mxu0 %v67
    %149 = vmatpush.msra.mxu0 %v63
    %150 = vmatpush.msra.mxu0 %v59
    %151 = vmatpush.msra.mxu0 %v55
    %152 = vmatpush.msra.mxu0 %v51
    %153 = vmatmul.f32.gmra.mxu0 %v114
    %v154 = vpop.f32.mrf.mxu0
    %v155 = vadd.f32 0.0, %v154
    %156 = vdwg.mxu0
    %157 = vmatpush.msra.mxu0 %v112
    %158 = vmatpush.msra.mxu0 %v108
    %159 = vmatpush.msra.mxu0 %v104
    %160 = vmatpush.msra.mxu0 %v100
    %161 = vmatpush.msra.mxu0 %v96
    %162 = vmatpush.msra.mxu0 %v92
    %163 = vmatpush.msra.mxu0 %v88
    %164 = vmatpush.msra.mxu0 %v84
    %165 = vmatpush.msra.mxu0 %v80
    %166 = vmatpush.msra.mxu0 %v76
    %167 = vmatpush.msra.mxu0 %v72
    %168 = vmatpush.msra.mxu0 %v68
    %169 = vmatpush.msra.mxu0 %v64
    %170 = vmatpush.msra.mxu0 %v60
    %171 = vmatpush.msra.mxu0 %v56
    %172 = vmatpush.msra.mxu0 %v52
    %173 = vmatmul.f32.gmra.mxu0 %v114
    %v174 = vpop.f32.mrf.mxu0
    %v175 = vadd.f32 0.0, %v174
    %176 = vdwg.mxu0
    %177 = vmatpush.msra.mxu0 %v113
    %178 = vmatpush.msra.mxu0 %v109
    %179 = vmatpush.msra.mxu0 %v105
    %180 = vmatpush.msra.mxu0 %v101
    %181 = vmatpush.msra.mxu0 %v97
    %182 = vmatpush.msra.mxu0 %v93
    %183 = vmatpush.msra.mxu0 %v89
    %184 = vmatpush.msra.mxu0 %v85
    %185 = vmatpush.msra.mxu0 %v81
    %186 = vmatpush.msra.mxu0 %v77
    %187 = vmatpush.msra.mxu0 %v73
    %188 = vmatpush.msra.mxu0 %v69
    %189 = vmatpush.msra.mxu0 %v65
    %190 = vmatpush.msra.mxu0 %v61
    %191 = vmatpush.msra.mxu0 %v57
    %192 = vmatpush.msra.mxu0 %v53
    %193 = vmatmul.f32.gmra.mxu0 %v114
    %v194 = vpop.f32.mrf.mxu0
    %v195 = vadd.f32 0.0, %v194
    %196 = vdwg.mxu0
    %v201 = vrot.slane %v155, 6
    %v202 = vrot.slane %v175, 4
    %v203 = vrot.slane %v195, 2
    %vm204 = vcmask 1041408
    %v205 = vsel %vm204, %v135, %v201
    %vm206 = vcmask 1045508
    %v207 = vsel %vm206, %v202, %v203
    %vm208 = vcmask 1043456
    %v209 = vsel %vm208, %v205, %v207
    %v211 = vadd.f32 %v116, %v209
    %v212 = vxor.u32 %v211, 2147483648
    %v213 = vmul.f32 %v212, 1.442695
    %v214 = vpow.pop %v213
    %v215 = vadd.f32 %v214, 1.0
    %v216 = vrcp.pop %v215
    %v217 = vmul.f32 %v215, %v216
    %v218 = vsub.f32 1.0, %v217
    %v219 = vmul.f32 %v216, %v218
    %v220 = vadd.f32 %v216, %v219
    %vm221 = vweird.f32 %v215
    %vm222 = vweird.f32 %v216
    %vm223 = vmor %vm221, %vm222
    %v224 = vsel %vm223, %v216, %v220
    %v225 = vand.u32 2147483647, %v215
    %vm226 = vcmp.eq.f32.partialorder %v225, 8.507059e+37
    %v227 = vand.u32 %v215, 2147483648
    %v228 = vor.u32 1.1754944e-38, %v227
    %v229 = vsel %vm226, %v228, %v224
    %v230 = vmul.f32 1.0, %v229
    %v232 = vrot.slane %v211, 6
    %v234 = vtanh.pop %v232
    %v236 = vrot.slane %v230, 2
    %v238 = vmul.f32 %v236, %v115
    %v239 = vmul.f32 %v230, %v234
    %v240 = vadd.f32 %v238, %v239
    %v241 = vtanh.pop %v240
    %v242 = vrot.slane %v230, 4
    %v244 = vmul.f32 %v242, %v241
    %s245 = scalar_lea.vmem [#allocation4], 8
    %v246 = vld [vmem:[%s245] sm:$0xff]
    %247 = vmatpush.msra.mxu0 %v110
    %248 = vmatpush.msra.mxu0 %v106
    %249 = vmatpush.msra.mxu0 %v102
    %250 = vmatpush.msra.mxu0 %v98
    %251 = vmatpush.msra.mxu0 %v94
    %252 = vmatpush.msra.mxu0 %v90
    %253 = vmatpush.msra.mxu0 %v86
    %254 = vmatpush.msra.mxu0 %v82
    %255 = vmatpush.msra.mxu0 %v78
    %256 = vmatpush.msra.mxu0 %v74
    %257 = vmatpush.msra.mxu0 %v70
    %258 = vmatpush.msra.mxu0 %v66
    %259 = vmatpush.msra.mxu0 %v62
    %260 = vmatpush.msra.mxu0 %v58
    %261 = vmatpush.msra.mxu0 %v54
    %262 = vmatpush.msra.mxu0 %v50
    %263 = vmatmul.f32.gmra.mxu0 %v244
    %v264 = vpop.f32.mrf.mxu0
    %v265 = vadd.f32 0.0, %v264
    %266 = vdwg.mxu0
    %267 = vmatpush.msra.mxu0 %v111
    %268 = vmatpush.msra.mxu0 %v107
    %269 = vmatpush.msra.mxu0 %v103
    %270 = vmatpush.msra.mxu0 %v99
    %271 = vmatpush.msra.mxu0 %v95
    %272 = vmatpush.msra.mxu0 %v91
    %273 = vmatpush.msra.mxu0 %v87
    %274 = vmatpush.msra.mxu0 %v83
    %275 = vmatpush.msra.mxu0 %v79
    %276 = vmatpush.msra.mxu0 %v75
    %277 = vmatpush.msra.mxu0 %v71
    %278 = vmatpush.msra.mxu0 %v67
    %279 = vmatpush.msra.mxu0 %v63
    %280 = vmatpush.msra.mxu0 %v59
    %281 = vmatpush.msra.mxu0 %v55
    %282 = vmatpush.msra.mxu0 %v51
    %283 = vmatmul.f32.gmra.mxu0 %v244
    %v284 = vpop.f32.mrf.mxu0
    %v285 = vadd.f32 0.0, %v284
    %286 = vdwg.mxu0
    %287 = vmatpush.msra.mxu0 %v112
    %288 = vmatpush.msra.mxu0 %v108
    %289 = vmatpush.msra.mxu0 %v104
    %290 = vmatpush.msra.mxu0 %v100
    %291 = vmatpush.msra.mxu0 %v96
    %292 = vmatpush.msra.mxu0 %v92
    %293 = vmatpush.msra.mxu0 %v88
    %294 = vmatpush.msra.mxu0 %v84
    %295 = vmatpush.msra.mxu0 %v80
    %296 = vmatpush.msra.mxu0 %v76
    %297 = vmatpush.msra.mxu0 %v72
    %298 = vmatpush.msra.mxu0 %v68
    %299 = vmatpush.msra.mxu0 %v64
    %300 = vmatpush.msra.mxu0 %v60
    %301 = vmatpush.msra.mxu0 %v56
    %302 = vmatpush.msra.mxu0 %v52
    %303 = vmatmul.f32.gmra.mxu0 %v244
    %v304 = vpop.f32.mrf.mxu0
    %v305 = vadd.f32 0.0, %v304
    %306 = vdwg.mxu0
    %307 = vmatpush.msra.mxu0 %v113
    %308 = vmatpush.msra.mxu0 %v109
    %309 = vmatpush.msra.mxu0 %v105
    %310 = vmatpush.msra.mxu0 %v101
    %311 = vmatpush.msra.mxu0 %v97
    %312 = vmatpush.msra.mxu0 %v93
    %313 = vmatpush.msra.mxu0 %v89
    %314 = vmatpush.msra.mxu0 %v85
    %315 = vmatpush.msra.mxu0 %v81
    %316 = vmatpush.msra.mxu0 %v77
    %317 = vmatpush.msra.mxu0 %v73
    %318 = vmatpush.msra.mxu0 %v69
    %319 = vmatpush.msra.mxu0 %v65
    %320 = vmatpush.msra.mxu0 %v61
    %321 = vmatpush.msra.mxu0 %v57
    %322 = vmatpush.msra.mxu0 %v53
    %323 = vmatmul.f32.gmra.mxu0 %v244
    %v324 = vpop.f32.mrf.mxu0
    %v325 = vadd.f32 0.0, %v324
    %326 = vdwg.mxu0
    %v331 = vrot.slane %v285, 6
    %v332 = vrot.slane %v305, 4
    %v333 = vrot.slane %v325, 2
    %v334 = vsel %vm204, %v265, %v331
    %v335 = vsel %vm206, %v332, %v333
    %v336 = vsel %vm208, %v334, %v335
    %v338 = vadd.f32 %v246, %v336
    %v339 = vxor.u32 %v338, 2147483648
    %v340 = vmul.f32 %v339, 1.442695
    %v341 = vpow.pop %v340
    %v342 = vadd.f32 %v341, 1.0
    %v343 = vrcp.pop %v342
    %v344 = vmul.f32 %v342, %v343
    %v345 = vsub.f32 1.0, %v344
    %v346 = vmul.f32 %v343, %v345
    %v347 = vadd.f32 %v343, %v346
    %vm348 = vweird.f32 %v342
    %vm349 = vweird.f32 %v343
    %vm350 = vmor %vm348, %vm349
    %v351 = vsel %vm350, %v343, %v347
    %v352 = vand.u32 2147483647, %v342
    %vm353 = vcmp.eq.f32.partialorder %v352, 8.507059e+37
    %v354 = vand.u32 %v342, 2147483648
    %v355 = vor.u32 1.1754944e-38, %v354
    %v356 = vsel %vm353, %v355, %v351
    %v357 = vmul.f32 1.0, %v356
    %v359 = vrot.slane %v338, 6
    %v361 = vtanh.pop %v359
    %v363 = vrot.slane %v357, 2
    %v365 = vmul.f32 %v363, %v240
    %v366 = vmul.f32 %v357, %v361
    %v367 = vadd.f32 %v365, %v366
    %v368 = vtanh.pop %v367
    %v369 = vrot.slane %v357, 4
    %v371 = vmul.f32 %v369, %v368
    %s372 = scalar_lea.vmem [#allocation4], 16
    %v373 = vld [vmem:[%s372] sm:$0xff]
    %374 = vmatpush.msra.mxu0 %v110
    %375 = vmatpush.msra.mxu0 %v106
    %376 = vmatpush.msra.mxu0 %v102
    %377 = vmatpush.msra.mxu0 %v98
    %378 = vmatpush.msra.mxu0 %v94
    %379 = vmatpush.msra.mxu0 %v90
    %380 = vmatpush.msra.mxu0 %v86
    %381 = vmatpush.msra.mxu0 %v82
    %382 = vmatpush.msra.mxu0 %v78
    %383 = vmatpush.msra.mxu0 %v74
    %384 = vmatpush.msra.mxu0 %v70
    %385 = vmatpush.msra.mxu0 %v66
    %386 = vmatpush.msra.mxu0 %v62
    %387 = vmatpush.msra.mxu0 %v58
    %388 = vmatpush.msra.mxu0 %v54
    %389 = vmatpush.msra.mxu0 %v50
    %390 = vmatmul.f32.gmra.mxu0 %v371
    %v391 = vpop.f32.mrf.mxu0
    %v392 = vadd.f32 0.0, %v391
    %393 = vdwg.mxu0
    %394 = vmatpush.msra.mxu0 %v111
    %395 = vmatpush.msra.mxu0 %v107
    %396 = vmatpush.msra.mxu0 %v103
    %397 = vmatpush.msra.mxu0 %v99
    %398 = vmatpush.msra.mxu0 %v95
    %399 = vmatpush.msra.mxu0 %v91
    %400 = vmatpush.msra.mxu0 %v87
    %401 = vmatpush.msra.mxu0 %v83
    %402 = vmatpush.msra.mxu0 %v79
    %403 = vmatpush.msra.mxu0 %v75
    %404 = vmatpush.msra.mxu0 %v71
    %405 = vmatpush.msra.mxu0 %v67
    %406 = vmatpush.msra.mxu0 %v63
    %407 = vmatpush.msra.mxu0 %v59
    %408 = vmatpush.msra.mxu0 %v55
    %409 = vmatpush.msra.mxu0 %v51
    %410 = vmatmul.f32.gmra.mxu0 %v371
    %v411 = vpop.f32.mrf.mxu0
    %v412 = vadd.f32 0.0, %v411
    %413 = vdwg.mxu0
    %414 = vmatpush.msra.mxu0 %v112
    %415 = vmatpush.msra.mxu0 %v108
    %416 = vmatpush.msra.mxu0 %v104
    %417 = vmatpush.msra.mxu0 %v100
    %418 = vmatpush.msra.mxu0 %v96
    %419 = vmatpush.msra.mxu0 %v92
    %420 = vmatpush.msra.mxu0 %v88
    %421 = vmatpush.msra.mxu0 %v84
    %422 = vmatpush.msra.mxu0 %v80
    %423 = vmatpush.msra.mxu0 %v76
    %424 = vmatpush.msra.mxu0 %v72
    %425 = vmatpush.msra.mxu0 %v68
    %426 = vmatpush.msra.mxu0 %v64
    %427 = vmatpush.msra.mxu0 %v60
    %428 = vmatpush.msra.mxu0 %v56
    %429 = vmatpush.msra.mxu0 %v52
    %430 = vmatmul.f32.gmra.mxu0 %v371
    %v431 = vpop.f32.mrf.mxu0
    %v432 = vadd.f32 0.0, %v431
    %433 = vdwg.mxu0
    %434 = vmatpush.msra.mxu0 %v113
    %435 = vmatpush.msra.mxu0 %v109
    %436 = vmatpush.msra.mxu0 %v105
    %437 = vmatpush.msra.mxu0 %v101
    %438 = vmatpush.msra.mxu0 %v97
    %439 = vmatpush.msra.mxu0 %v93
    %440 = vmatpush.msra.mxu0 %v89
    %441 = vmatpush.msra.mxu0 %v85
    %442 = vmatpush.msra.mxu0 %v81
    %443 = vmatpush.msra.mxu0 %v77
    %444 = vmatpush.msra.mxu0 %v73
    %445 = vmatpush.msra.mxu0 %v69
    %446 = vmatpush.msra.mxu0 %v65
    %447 = vmatpush.msra.mxu0 %v61
    %448 = vmatpush.msra.mxu0 %v57
    %449 = vmatpush.msra.mxu0 %v53
    %450 = vmatmul.f32.gmra.mxu0 %v371
    %v451 = vpop.f32.mrf.mxu0
    %v452 = vadd.f32 0.0, %v451
    %453 = vdwg.mxu0
    %v458 = vrot.slane %v412, 6
    %v459 = vrot.slane %v432, 4
    %v460 = vrot.slane %v452, 2
    %v461 = vsel %vm204, %v392, %v458
    %v462 = vsel %vm206, %v459, %v460
    %v463 = vsel %vm208, %v461, %v462
    %v465 = vadd.f32 %v373, %v463
    %v466 = vxor.u32 %v465, 2147483648
    %v467 = vmul.f32 %v466, 1.442695
    %v468 = vpow.pop %v467
    %v469 = vadd.f32 %v468, 1.0
    %v470 = vrcp.pop %v469
    %v471 = vmul.f32 %v469, %v470
    %v472 = vsub.f32 1.0, %v471
    %v473 = vmul.f32 %v470, %v472
    %v474 = vadd.f32 %v470, %v473
    %vm475 = vweird.f32 %v469
    %vm476 = vweird.f32 %v470
    %vm477 = vmor %vm475, %vm476
    %v478 = vsel %vm477, %v470, %v474
    %v479 = vand.u32 2147483647, %v469
    %vm480 = vcmp.eq.f32.partialorder %v479, 8.507059e+37
    %v481 = vand.u32 %v469, 2147483648
    %v482 = vor.u32 1.1754944e-38, %v481
    %v483 = vsel %vm480, %v482, %v478
    %v484 = vmul.f32 1.0, %v483
    %v486 = vrot.slane %v465, 6
    %v488 = vtanh.pop %v486
    %v490 = vrot.slane %v484, 2
    %v492 = vmul.f32 %v490, %v367
    %v493 = vmul.f32 %v484, %v488
    %v494 = vadd.f32 %v492, %v493
    %v495 = vtanh.pop %v494
    %v496 = vrot.slane %v484, 4
    %v498 = vmul.f32 %v496, %v495
    %s499 = scalar_lea.vmem [#allocation4], 24
    %v500 = vld [vmem:[%s499] sm:$0xff]
    %501 = vmatpush.msra.mxu0 %v110
    %502 = vmatpush.msra.mxu0 %v106
    %503 = vmatpush.msra.mxu0 %v102
    %504 = vmatpush.msra.mxu0 %v98
    %505 = vmatpush.msra.mxu0 %v94
    %506 = vmatpush.msra.mxu0 %v90
    %507 = vmatpush.msra.mxu0 %v86
    %508 = vmatpush.msra.mxu0 %v82
    %509 = vmatpush.msra.mxu0 %v78
    %510 = vmatpush.msra.mxu0 %v74
    %511 = vmatpush.msra.mxu0 %v70
    %512 = vmatpush.msra.mxu0 %v66
    %513 = vmatpush.msra.mxu0 %v62
    %514 = vmatpush.msra.mxu0 %v58
    %515 = vmatpush.msra.mxu0 %v54
    %516 = vmatpush.msra.mxu0 %v50
    %517 = vmatmul.f32.gmra.mxu0 %v498
    %v518 = vpop.f32.mrf.mxu0
    %v519 = vadd.f32 0.0, %v518
    %520 = vdwg.mxu0
    %521 = vmatpush.msra.mxu0 %v111
    %522 = vmatpush.msra.mxu0 %v107
    %523 = vmatpush.msra.mxu0 %v103
    %524 = vmatpush.msra.mxu0 %v99
    %525 = vmatpush.msra.mxu0 %v95
    %526 = vmatpush.msra.mxu0 %v91
    %527 = vmatpush.msra.mxu0 %v87
    %528 = vmatpush.msra.mxu0 %v83
    %529 = vmatpush.msra.mxu0 %v79
    %530 = vmatpush.msra.mxu0 %v75
    %531 = vmatpush.msra.mxu0 %v71
    %532 = vmatpush.msra.mxu0 %v67
    %533 = vmatpush.msra.mxu0 %v63
    %534 = vmatpush.msra.mxu0 %v59
    %535 = vmatpush.msra.mxu0 %v55
    %536 = vmatpush.msra.mxu0 %v51
    %537 = vmatmul.f32.gmra.mxu0 %v498
    %v538 = vpop.f32.mrf.mxu0
    %v539 = vadd.f32 0.0, %v538
    %540 = vdwg.mxu0
    %541 = vmatpush.msra.mxu0 %v112
    %542 = vmatpush.msra.mxu0 %v108
    %543 = vmatpush.msra.mxu0 %v104
    %544 = vmatpush.msra.mxu0 %v100
    %545 = vmatpush.msra.mxu0 %v96
    %546 = vmatpush.msra.mxu0 %v92
    %547 = vmatpush.msra.mxu0 %v88
    %548 = vmatpush.msra.mxu0 %v84
    %549 = vmatpush.msra.mxu0 %v80
    %550 = vmatpush.msra.mxu0 %v76
    %551 = vmatpush.msra.mxu0 %v72
    %552 = vmatpush.msra.mxu0 %v68
    %553 = vmatpush.msra.mxu0 %v64
    %554 = vmatpush.msra.mxu0 %v60
    %555 = vmatpush.msra.mxu0 %v56
    %556 = vmatpush.msra.mxu0 %v52
    %557 = vmatmul.f32.gmra.mxu0 %v498
    %v558 = vpop.f32.mrf.mxu0
    %v559 = vadd.f32 0.0, %v558
    %560 = vdwg.mxu0
    %561 = vmatpush.msra.mxu0 %v113
    %562 = vmatpush.msra.mxu0 %v109
    %563 = vmatpush.msra.mxu0 %v105
    %564 = vmatpush.msra.mxu0 %v101
    %565 = vmatpush.msra.mxu0 %v97
    %566 = vmatpush.msra.mxu0 %v93
    %567 = vmatpush.msra.mxu0 %v89
    %568 = vmatpush.msra.mxu0 %v85
    %569 = vmatpush.msra.mxu0 %v81
    %570 = vmatpush.msra.mxu0 %v77
    %571 = vmatpush.msra.mxu0 %v73
    %572 = vmatpush.msra.mxu0 %v69
    %573 = vmatpush.msra.mxu0 %v65
    %574 = vmatpush.msra.mxu0 %v61
    %575 = vmatpush.msra.mxu0 %v57
    %576 = vmatpush.msra.mxu0 %v53
    %577 = vmatmul.f32.gmra.mxu0 %v498
    %v578 = vpop.f32.mrf.mxu0
    %v579 = vadd.f32 0.0, %v578
    %580 = vdwg.mxu0
    %v585 = vrot.slane %v539, 6
    %v586 = vrot.slane %v559, 4
    %v587 = vrot.slane %v579, 2
    %v588 = vsel %vm204, %v519, %v585
    %v589 = vsel %vm206, %v586, %v587
    %v590 = vsel %vm208, %v588, %v589
    %v592 = vadd.f32 %v500, %v590
    %v593 = vxor.u32 %v592, 2147483648
    %v594 = vmul.f32 %v593, 1.442695
    %v595 = vpow.pop %v594
    %v596 = vadd.f32 %v595, 1.0
    %v597 = vrcp.pop %v596
    %v598 = vmul.f32 %v596, %v597
    %v599 = vsub.f32 1.0, %v598
    %v600 = vmul.f32 %v597, %v599
    %v601 = vadd.f32 %v597, %v600
    %vm602 = vweird.f32 %v596
    %vm603 = vweird.f32 %v597
    %vm604 = vmor %vm602, %vm603
    %v605 = vsel %vm604, %v597, %v601
    %v606 = vand.u32 2147483647, %v596
    %vm607 = vcmp.eq.f32.partialorder %v606, 8.507059e+37
    %v608 = vand.u32 %v596, 2147483648
    %v609 = vor.u32 1.1754944e-38, %v608
    %v610 = vsel %vm607, %v609, %v605
    %v611 = vmul.f32 1.0, %v610
    %v613 = vrot.slane %v592, 6
    %v615 = vtanh.pop %v613
    %v617 = vrot.slane %v611, 2
    %v619 = vmul.f32 %v617, %v494
    %v620 = vmul.f32 %v611, %v615
    %v621 = vadd.f32 %v619, %v620
    %v622 = vtanh.pop %v621
    %v623 = vrot.slane %v611, 4
    %v625 = vmul.f32 %v623, %v622
    %s626 = scalar_lea.vmem [#allocation4], 32
    %v627 = vld [vmem:[%s626] sm:$0xff]
    %628 = vmatpush.msra.mxu0 %v110
    %629 = vmatpush.msra.mxu0 %v106
    %630 = vmatpush.msra.mxu0 %v102
    %631 = vmatpush.msra.mxu0 %v98
    %632 = vmatpush.msra.mxu0 %v94
    %633 = vmatpush.msra.mxu0 %v90
    %634 = vmatpush.msra.mxu0 %v86
    %635 = vmatpush.msra.mxu0 %v82
    %636 = vmatpush.msra.mxu0 %v78
    %637 = vmatpush.msra.mxu0 %v74
    %638 = vmatpush.msra.mxu0 %v70
    %639 = vmatpush.msra.mxu0 %v66
    %640 = vmatpush.msra.mxu0 %v62
    %641 = vmatpush.msra.mxu0 %v58
    %642 = vmatpush.msra.mxu0 %v54
    %643 = vmatpush.msra.mxu0 %v50
    %644 = vmatmul.f32.gmra.mxu0 %v625
    %v645 = vpop.f32.mrf.mxu0
    %v646 = vadd.f32 0.0, %v645
    %647 = vdwg.mxu0
    %648 = vmatpush.msra.mxu0 %v111
    %649 = vmatpush.msra.mxu0 %v107
    %650 = vmatpush.msra.mxu0 %v103
    %651 = vmatpush.msra.mxu0 %v99
    %652 = vmatpush.msra.mxu0 %v95
    %653 = vmatpush.msra.mxu0 %v91
    %654 = vmatpush.msra.mxu0 %v87
    %655 = vmatpush.msra.mxu0 %v83
    %656 = vmatpush.msra.mxu0 %v79
    %657 = vmatpush.msra.mxu0 %v75
    %658 = vmatpush.msra.mxu0 %v71
    %659 = vmatpush.msra.mxu0 %v67
    %660 = vmatpush.msra.mxu0 %v63
    %661 = vmatpush.msra.mxu0 %v59
    %662 = vmatpush.msra.mxu0 %v55
    %663 = vmatpush.msra.mxu0 %v51
    %664 = vmatmul.f32.gmra.mxu0 %v625
    %v665 = vpop.f32.mrf.mxu0
    %v666 = vadd.f32 0.0, %v665
    %667 = vdwg.mxu0
    %668 = vmatpush.msra.mxu0 %v112
    %669 = vmatpush.msra.mxu0 %v108
    %670 = vmatpush.msra.mxu0 %v104
    %671 = vmatpush.msra.mxu0 %v100
    %672 = vmatpush.msra.mxu0 %v96
    %673 = vmatpush.msra.mxu0 %v92
    %674 = vmatpush.msra.mxu0 %v88
    %675 = vmatpush.msra.mxu0 %v84
    %676 = vmatpush.msra.mxu0 %v80
    %677 = vmatpush.msra.mxu0 %v76
    %678 = vmatpush.msra.mxu0 %v72
    %679 = vmatpush.msra.mxu0 %v68
    %680 = vmatpush.msra.mxu0 %v64
    %681 = vmatpush.msra.mxu0 %v60
    %682 = vmatpush.msra.mxu0 %v56
    %683 = vmatpush.msra.mxu0 %v52
    %684 = vmatmul.f32.gmra.mxu0 %v625
    %v685 = vpop.f32.mrf.mxu0
    %v686 = vadd.f32 0.0, %v685
    %687 = vdwg.mxu0
    %688 = vmatpush.msra.mxu0 %v113
    %689 = vmatpush.msra.mxu0 %v109
    %690 = vmatpush.msra.mxu0 %v105
    %691 = vmatpush.msra.mxu0 %v101
    %692 = vmatpush.msra.mxu0 %v97
    %693 = vmatpush.msra.mxu0 %v93
    %694 = vmatpush.msra.mxu0 %v89
    %695 = vmatpush.msra.mxu0 %v85
    %696 = vmatpush.msra.mxu0 %v81
    %697 = vmatpush.msra.mxu0 %v77
    %698 = vmatpush.msra.mxu0 %v73
    %699 = vmatpush.msra.mxu0 %v69
    %700 = vmatpush.msra.mxu0 %v65
    %701 = vmatpush.msra.mxu0 %v61
    %702 = vmatpush.msra.mxu0 %v57
    %703 = vmatpush.msra.mxu0 %v53
    %704 = vmatmul.f32.gmra.mxu0 %v625
    %v705 = vpop.f32.mrf.mxu0
    %v706 = vadd.f32 0.0, %v705
    %707 = vdwg.mxu0
    %v712 = vrot.slane %v666, 6
    %v713 = vrot.slane %v686, 4
    %v714 = vrot.slane %v706, 2
    %v715 = vsel %vm204, %v646, %v712
    %v716 = vsel %vm206, %v713, %v714
    %v717 = vsel %vm208, %v715, %v716
    %v719 = vadd.f32 %v627, %v717
    %v720 = vxor.u32 %v719, 2147483648
    %v721 = vmul.f32 %v720, 1.442695
    %v722 = vpow.pop %v721
    %v723 = vadd.f32 %v722, 1.0
    %v724 = vrcp.pop %v723
    %v725 = vmul.f32 %v723, %v724
    %v726 = vsub.f32 1.0, %v725
    %v727 = vmul.f32 %v724, %v726
    %v728 = vadd.f32 %v724, %v727
    %vm729 = vweird.f32 %v723
    %vm730 = vweird.f32 %v724
    %vm731 = vmor %vm729, %vm730
    %v732 = vsel %vm731, %v724, %v728
    %v733 = vand.u32 2147483647, %v723
    %vm734 = vcmp.eq.f32.partialorder %v733, 8.507059e+37
    %v735 = vand.u32 %v723, 2147483648
    %v736 = vor.u32 1.1754944e-38, %v735
    %v737 = vsel %vm734, %v736, %v732
    %v738 = vmul.f32 1.0, %v737
    %v740 = vrot.slane %v719, 6
    %v742 = vtanh.pop %v740
    %v744 = vrot.slane %v738, 2
    %v746 = vmul.f32 %v744, %v621
    %v747 = vmul.f32 %v738, %v742
    %v748 = vadd.f32 %v746, %v747
    %v749 = vtanh.pop %v748
    %v750 = vrot.slane %v738, 4
    %v752 = vmul.f32 %v750, %v749
    %s753 = scalar_lea.vmem [#allocation4], 40
    %v754 = vld [vmem:[%s753] sm:$0xff]
    %755 = vmatpush.msra.mxu0 %v110
    %756 = vmatpush.msra.mxu0 %v106
    %757 = vmatpush.msra.mxu0 %v102
    %758 = vmatpush.msra.mxu0 %v98
    %759 = vmatpush.msra.mxu0 %v94
    %760 = vmatpush.msra.mxu0 %v90
    %761 = vmatpush.msra.mxu0 %v86
    %762 = vmatpush.msra.mxu0 %v82
    %763 = vmatpush.msra.mxu0 %v78
    %764 = vmatpush.msra.mxu0 %v74
    %765 = vmatpush.msra.mxu0 %v70
    %766 = vmatpush.msra.mxu0 %v66
    %767 = vmatpush.msra.mxu0 %v62
    %768 = vmatpush.msra.mxu0 %v58
    %769 = vmatpush.msra.mxu0 %v54
    %770 = vmatpush.msra.mxu0 %v50
    %771 = vmatmul.f32.gmra.mxu0 %v752
    %v772 = vpop.f32.mrf.mxu0
    %v773 = vadd.f32 0.0, %v772
    %774 = vdwg.mxu0
    %775 = vmatpush.msra.mxu0 %v111
    %776 = vmatpush.msra.mxu0 %v107
    %777 = vmatpush.msra.mxu0 %v103
    %778 = vmatpush.msra.mxu0 %v99
    %779 = vmatpush.msra.mxu0 %v95
    %780 = vmatpush.msra.mxu0 %v91
    %781 = vmatpush.msra.mxu0 %v87
    %782 = vmatpush.msra.mxu0 %v83
    %783 = vmatpush.msra.mxu0 %v79
    %784 = vmatpush.msra.mxu0 %v75
    %785 = vmatpush.msra.mxu0 %v71
    %786 = vmatpush.msra.mxu0 %v67
    %787 = vmatpush.msra.mxu0 %v63
    %788 = vmatpush.msra.mxu0 %v59
    %789 = vmatpush.msra.mxu0 %v55
    %790 = vmatpush.msra.mxu0 %v51
    %791 = vmatmul.f32.gmra.mxu0 %v752
    %v792 = vpop.f32.mrf.mxu0
    %v793 = vadd.f32 0.0, %v792
    %794 = vdwg.mxu0
    %795 = vmatpush.msra.mxu0 %v112
    %796 = vmatpush.msra.mxu0 %v108
    %797 = vmatpush.msra.mxu0 %v104
    %798 = vmatpush.msra.mxu0 %v100
    %799 = vmatpush.msra.mxu0 %v96
    %800 = vmatpush.msra.mxu0 %v92
    %801 = vmatpush.msra.mxu0 %v88
    %802 = vmatpush.msra.mxu0 %v84
    %803 = vmatpush.msra.mxu0 %v80
    %804 = vmatpush.msra.mxu0 %v76
    %805 = vmatpush.msra.mxu0 %v72
    %806 = vmatpush.msra.mxu0 %v68
    %807 = vmatpush.msra.mxu0 %v64
    %808 = vmatpush.msra.mxu0 %v60
    %809 = vmatpush.msra.mxu0 %v56
    %810 = vmatpush.msra.mxu0 %v52
    %811 = vmatmul.f32.gmra.mxu0 %v752
    %v812 = vpop.f32.mrf.mxu0
    %v813 = vadd.f32 0.0, %v812
    %814 = vdwg.mxu0
    %815 = vmatpush.msra.mxu0 %v113
    %816 = vmatpush.msra.mxu0 %v109
    %817 = vmatpush.msra.mxu0 %v105
    %818 = vmatpush.msra.mxu0 %v101
    %819 = vmatpush.msra.mxu0 %v97
    %820 = vmatpush.msra.mxu0 %v93
    %821 = vmatpush.msra.mxu0 %v89
    %822 = vmatpush.msra.mxu0 %v85
    %823 = vmatpush.msra.mxu0 %v81
    %824 = vmatpush.msra.mxu0 %v77
    %825 = vmatpush.msra.mxu0 %v73
    %826 = vmatpush.msra.mxu0 %v69
    %827 = vmatpush.msra.mxu0 %v65
    %828 = vmatpush.msra.mxu0 %v61
    %829 = vmatpush.msra.mxu0 %v57
    %830 = vmatpush.msra.mxu0 %v53
    %831 = vmatmul.f32.gmra.mxu0 %v752
    %v832 = vpop.f32.mrf.mxu0
    %v833 = vadd.f32 0.0, %v832
    %834 = vdwg.mxu0
    %v839 = vrot.slane %v793, 6
    %v840 = vrot.slane %v813, 4
    %v841 = vrot.slane %v833, 2
    %v842 = vsel %vm204, %v773, %v839
    %v843 = vsel %vm206, %v840, %v841
    %v844 = vsel %vm208, %v842, %v843
    %v846 = vadd.f32 %v754, %v844
    %v847 = vxor.u32 %v846, 2147483648
    %v848 = vmul.f32 %v847, 1.442695
    %v849 = vpow.pop %v848
    %v850 = vadd.f32 %v849, 1.0
    %v851 = vrcp.pop %v850
    %v852 = vmul.f32 %v850, %v851
    %v853 = vsub.f32 1.0, %v852
    %v854 = vmul.f32 %v851, %v853
    %v855 = vadd.f32 %v851, %v854
    %vm856 = vweird.f32 %v850
    %vm857 = vweird.f32 %v851
    %vm858 = vmor %vm856, %vm857
    %v859 = vsel %vm858, %v851, %v855
    %v860 = vand.u32 2147483647, %v850
    %vm861 = vcmp.eq.f32.partialorder %v860, 8.507059e+37
    %v862 = vand.u32 %v850, 2147483648
    %v863 = vor.u32 1.1754944e-38, %v862
    %v864 = vsel %vm861, %v863, %v859
    %v865 = vmul.f32 1.0, %v864
    %v867 = vrot.slane %v846, 6
    %v869 = vtanh.pop %v867
    %v871 = vrot.slane %v865, 2
    %v873 = vmul.f32 %v871, %v748
    %v874 = vmul.f32 %v865, %v869
    %v875 = vadd.f32 %v873, %v874
    %v876 = vtanh.pop %v875
    %v877 = vrot.slane %v865, 4
    %v879 = vmul.f32 %v877, %v876
    %s880 = scalar_lea.vmem [#allocation4], 48
    %v881 = vld [vmem:[%s880] sm:$0xff]
    %882 = vmatpush.msra.mxu0 %v110
    %883 = vmatpush.msra.mxu0 %v106
    %884 = vmatpush.msra.mxu0 %v102
    %885 = vmatpush.msra.mxu0 %v98
    %886 = vmatpush.msra.mxu0 %v94
    %887 = vmatpush.msra.mxu0 %v90
    %888 = vmatpush.msra.mxu0 %v86
    %889 = vmatpush.msra.mxu0 %v82
    %890 = vmatpush.msra.mxu0 %v78
    %891 = vmatpush.msra.mxu0 %v74
    %892 = vmatpush.msra.mxu0 %v70
    %893 = vmatpush.msra.mxu0 %v66
    %894 = vmatpush.msra.mxu0 %v62
    %895 = vmatpush.msra.mxu0 %v58
    %896 = vmatpush.msra.mxu0 %v54
    %897 = vmatpush.msra.mxu0 %v50
    %898 = vmatmul.f32.gmra.mxu0 %v879
    %v899 = vpop.f32.mrf.mxu0
    %v900 = vadd.f32 0.0, %v899
    %901 = vdwg.mxu0
    %902 = vmatpush.msra.mxu0 %v111
    %903 = vmatpush.msra.mxu0 %v107
    %904 = vmatpush.msra.mxu0 %v103
    %905 = vmatpush.msra.mxu0 %v99
    %906 = vmatpush.msra.mxu0 %v95
    %907 = vmatpush.msra.mxu0 %v91
    %908 = vmatpush.msra.mxu0 %v87
    %909 = vmatpush.msra.mxu0 %v83
    %910 = vmatpush.msra.mxu0 %v79
    %911 = vmatpush.msra.mxu0 %v75
    %912 = vmatpush.msra.mxu0 %v71
    %913 = vmatpush.msra.mxu0 %v67
    %914 = vmatpush.msra.mxu0 %v63
    %915 = vmatpush.msra.mxu0 %v59
    %916 = vmatpush.msra.mxu0 %v55
    %917 = vmatpush.msra.mxu0 %v51
    %918 = vmatmul.f32.gmra.mxu0 %v879
    %v919 = vpop.f32.mrf.mxu0
    %v920 = vadd.f32 0.0, %v919
    %921 = vdwg.mxu0
    %922 = vmatpush.msra.mxu0 %v112
    %923 = vmatpush.msra.mxu0 %v108
    %924 = vmatpush.msra.mxu0 %v104
    %925 = vmatpush.msra.mxu0 %v100
    %926 = vmatpush.msra.mxu0 %v96
    %927 = vmatpush.msra.mxu0 %v92
    %928 = vmatpush.msra.mxu0 %v88
    %929 = vmatpush.msra.mxu0 %v84
    %930 = vmatpush.msra.mxu0 %v80
    %931 = vmatpush.msra.mxu0 %v76
    %932 = vmatpush.msra.mxu0 %v72
    %933 = vmatpush.msra.mxu0 %v68
    %934 = vmatpush.msra.mxu0 %v64
    %935 = vmatpush.msra.mxu0 %v60
    %936 = vmatpush.msra.mxu0 %v56
    %937 = vmatpush.msra.mxu0 %v52
    %938 = vmatmul.f32.gmra.mxu0 %v879
    %v939 = vpop.f32.mrf.mxu0
    %v940 = vadd.f32 0.0, %v939
    %941 = vdwg.mxu0
    %942 = vmatpush.msra.mxu0 %v113
    %943 = vmatpush.msra.mxu0 %v109
    %944 = vmatpush.msra.mxu0 %v105
    %945 = vmatpush.msra.mxu0 %v101
    %946 = vmatpush.msra.mxu0 %v97
    %947 = vmatpush.msra.mxu0 %v93
    %948 = vmatpush.msra.mxu0 %v89
    %949 = vmatpush.msra.mxu0 %v85
    %950 = vmatpush.msra.mxu0 %v81
    %951 = vmatpush.msra.mxu0 %v77
    %952 = vmatpush.msra.mxu0 %v73
    %953 = vmatpush.msra.mxu0 %v69
    %954 = vmatpush.msra.mxu0 %v65
    %955 = vmatpush.msra.mxu0 %v61
    %956 = vmatpush.msra.mxu0 %v57
    %957 = vmatpush.msra.mxu0 %v53
    %958 = vmatmul.f32.gmra.mxu0 %v879
    %v959 = vpop.f32.mrf.mxu0
    %v960 = vadd.f32 0.0, %v959
    %961 = vdwg.mxu0
    %v966 = vrot.slane %v920, 6
    %v967 = vrot.slane %v940, 4
    %v968 = vrot.slane %v960, 2
    %v969 = vsel %vm204, %v900, %v966
    %v970 = vsel %vm206, %v967, %v968
    %v971 = vsel %vm208, %v969, %v970
    %v973 = vadd.f32 %v881, %v971
    %v974 = vxor.u32 %v973, 2147483648
    %v975 = vmul.f32 %v974, 1.442695
    %v976 = vpow.pop %v975
    %v977 = vadd.f32 %v976, 1.0
    %v978 = vrcp.pop %v977
    %v979 = vmul.f32 %v977, %v978
    %v980 = vsub.f32 1.0, %v979
    %v981 = vmul.f32 %v978, %v980
    %v982 = vadd.f32 %v978, %v981
    %vm983 = vweird.f32 %v977
    %vm984 = vweird.f32 %v978
    %vm985 = vmor %vm983, %vm984
    %v986 = vsel %vm985, %v978, %v982
    %v987 = vand.u32 2147483647, %v977
    %vm988 = vcmp.eq.f32.partialorder %v987, 8.507059e+37
    %v989 = vand.u32 %v977, 2147483648
    %v990 = vor.u32 1.1754944e-38, %v989
    %v991 = vsel %vm988, %v990, %v986
    %v992 = vmul.f32 1.0, %v991
    %v994 = vrot.slane %v973, 6
    %v996 = vtanh.pop %v994
    %v998 = vrot.slane %v992, 2
    %v1000 = vmul.f32 %v998, %v875
    %v1001 = vmul.f32 %v992, %v996
    %v1002 = vadd.f32 %v1000, %v1001
    %v1003 = vtanh.pop %v1002
    %v1004 = vrot.slane %v992, 4
    %v1006 = vmul.f32 %v1004, %v1003
    %s1007 = scalar_lea.vmem [#allocation4], 56
    %v1008 = vld [vmem:[%s1007] sm:$0xff]
    %1009 = vmatpush.msra.mxu0 %v110
    %1010 = vmatpush.msra.mxu0 %v106
    %1011 = vmatpush.msra.mxu0 %v102
    %1012 = vmatpush.msra.mxu0 %v98
    %1013 = vmatpush.msra.mxu0 %v94
    %1014 = vmatpush.msra.mxu0 %v90
    %1015 = vmatpush.msra.mxu0 %v86
    %1016 = vmatpush.msra.mxu0 %v82
    %1017 = vmatpush.msra.mxu0 %v78
    %1018 = vmatpush.msra.mxu0 %v74
    %1019 = vmatpush.msra.mxu0 %v70
    %1020 = vmatpush.msra.mxu0 %v66
    %1021 = vmatpush.msra.mxu0 %v62
    %1022 = vmatpush.msra.mxu0 %v58
    %1023 = vmatpush.msra.mxu0 %v54
    %1024 = vmatpush.msra.mxu0 %v50
    %1025 = vmatmul.f32.gmra.mxu0 %v1006
    %v1026 = vpop.f32.mrf.mxu0
    %v1027 = vadd.f32 0.0, %v1026
    %1028 = vdwg.mxu0
    %1029 = vmatpush.msra.mxu0 %v111
    %1030 = vmatpush.msra.mxu0 %v107
    %1031 = vmatpush.msra.mxu0 %v103
    %1032 = vmatpush.msra.mxu0 %v99
    %1033 = vmatpush.msra.mxu0 %v95
    %1034 = vmatpush.msra.mxu0 %v91
    %1035 = vmatpush.msra.mxu0 %v87
    %1036 = vmatpush.msra.mxu0 %v83
    %1037 = vmatpush.msra.mxu0 %v79
    %1038 = vmatpush.msra.mxu0 %v75
    %1039 = vmatpush.msra.mxu0 %v71
    %1040 = vmatpush.msra.mxu0 %v67
    %1041 = vmatpush.msra.mxu0 %v63
    %1042 = vmatpush.msra.mxu0 %v59
    %1043 = vmatpush.msra.mxu0 %v55
    %1044 = vmatpush.msra.mxu0 %v51
    %1045 = vmatmul.f32.gmra.mxu0 %v1006
    %v1046 = vpop.f32.mrf.mxu0
    %v1047 = vadd.f32 0.0, %v1046
    %1048 = vdwg.mxu0
    %1049 = vmatpush.msra.mxu0 %v112
    %1050 = vmatpush.msra.mxu0 %v108
    %1051 = vmatpush.msra.mxu0 %v104
    %1052 = vmatpush.msra.mxu0 %v100
    %1053 = vmatpush.msra.mxu0 %v96
    %1054 = vmatpush.msra.mxu0 %v92
    %1055 = vmatpush.msra.mxu0 %v88
    %1056 = vmatpush.msra.mxu0 %v84
    %1057 = vmatpush.msra.mxu0 %v80
    %1058 = vmatpush.msra.mxu0 %v76
    %1059 = vmatpush.msra.mxu0 %v72
    %1060 = vmatpush.msra.mxu0 %v68
    %1061 = vmatpush.msra.mxu0 %v64
    %1062 = vmatpush.msra.mxu0 %v60
    %1063 = vmatpush.msra.mxu0 %v56
    %1064 = vmatpush.msra.mxu0 %v52
    %1065 = vmatmul.f32.gmra.mxu0 %v1006
    %v1066 = vpop.f32.mrf.mxu0
    %v1067 = vadd.f32 0.0, %v1066
    %1068 = vdwg.mxu0
    %1069 = vmatpush.msra.mxu0 %v113
    %1070 = vmatpush.msra.mxu0 %v109
    %1071 = vmatpush.msra.mxu0 %v105
    %1072 = vmatpush.msra.mxu0 %v101
    %1073 = vmatpush.msra.mxu0 %v97
    %1074 = vmatpush.msra.mxu0 %v93
    %1075 = vmatpush.msra.mxu0 %v89
    %1076 = vmatpush.msra.mxu0 %v85
    %1077 = vmatpush.msra.mxu0 %v81
    %1078 = vmatpush.msra.mxu0 %v77
    %1079 = vmatpush.msra.mxu0 %v73
    %1080 = vmatpush.msra.mxu0 %v69
    %1081 = vmatpush.msra.mxu0 %v65
    %1082 = vmatpush.msra.mxu0 %v61
    %1083 = vmatpush.msra.mxu0 %v57
    %1084 = vmatpush.msra.mxu0 %v53
    %1085 = vmatmul.f32.gmra.mxu0 %v1006
    %v1086 = vpop.f32.mrf.mxu0
    %v1087 = vadd.f32 0.0, %v1086
    %1088 = vdwg.mxu0
    %v1093 = vrot.slane %v1047, 6
    %v1094 = vrot.slane %v1067, 4
    %v1095 = vrot.slane %v1087, 2
    %v1096 = vsel %vm204, %v1027, %v1093
    %v1097 = vsel %vm206, %v1094, %v1095
    %v1098 = vsel %vm208, %v1096, %v1097
    %v1100 = vadd.f32 %v1008, %v1098
    %v1101 = vxor.u32 %v1100, 2147483648
    %v1102 = vmul.f32 %v1101, 1.442695
    %v1103 = vpow.pop %v1102
    %v1104 = vadd.f32 %v1103, 1.0
    %v1105 = vrcp.pop %v1104
    %v1106 = vmul.f32 %v1104, %v1105
    %v1107 = vsub.f32 1.0, %v1106
    %v1108 = vmul.f32 %v1105, %v1107
    %v1109 = vadd.f32 %v1105, %v1108
    %vm1110 = vweird.f32 %v1104
    %vm1111 = vweird.f32 %v1105
    %vm1112 = vmor %vm1110, %vm1111
    %v1113 = vsel %vm1112, %v1105, %v1109
    %v1114 = vand.u32 2147483647, %v1104
    %vm1115 = vcmp.eq.f32.partialorder %v1114, 8.507059e+37
    %v1116 = vand.u32 %v1104, 2147483648
    %v1117 = vor.u32 1.1754944e-38, %v1116
    %v1118 = vsel %vm1115, %v1117, %v1113
    %v1119 = vmul.f32 1.0, %v1118
    %v1121 = vrot.slane %v1100, 6
    %v1123 = vtanh.pop %v1121
    %v1125 = vrot.slane %v1119, 2
    %v1127 = vmul.f32 %v1125, %v1002
    %v1128 = vmul.f32 %v1119, %v1123
    %v1129 = vadd.f32 %v1127, %v1128
    %v1130 = vtanh.pop %v1129
    %v1131 = vrot.slane %v1119, 4
    %v1133 = vmul.f32 %v1131, %v1130
    %1134 = vst [vmem:[#allocation2] sm:$0x3] %v1133
    %1135 = vst [vmem:[#allocation3] sm:$0x3] %v1129
    // Predicated region
    $region22: #{tpu_custom_call.1} parent=1 // pred_check
      %p1136 = pneg %p44
    $region23: #{tpu_custom_call.1} parent=1 // pred_check_branch
      %1138 = sbr.rel (%p1136) target = $region25
    $region24: #{tpu_custom_call.1} parent=1 // pred_region
      %1139 = vst [vmem:[#allocation9] sm:$0x3] %v1133
    $region25: #{tpu_custom_call.1} parent=1 // pred_fallthru
      _
    // Predicated region
    $region26: #{tpu_custom_call.1} parent=1 // pred_check
      _
    $region27: #{tpu_custom_call.1} parent=1 // pred_check_branch
      %1141 = sbr.rel (0) target = $region29
    $region28: #{tpu_custom_call.1} parent=1 // pred_region
      %1143 = vsyncadd [#allocation6], 0
      %s1145 = sshll.u32 [#allocation9], 4
      %s1146 = int_to_ptr.vmem [resolvable:$true] %s1145
      %s1147 = sshll.u32 %s2, 4
      %s1148 = int_to_ptr.hbm [resolvable:$true] %s1147
      %1150 = dma.vmem_to_hbm [thread:$0]  %s1146, 32, %s1148, [#allocation6]
    $region29: #{tpu_custom_call.1} parent=1 // pred_fallthru
      _
    // Predicated region
    $region30: #{tpu_custom_call.1} parent=1 // pred_check
      _
    $region31: #{tpu_custom_call.1} parent=1 // pred_check_branch
      %1152 = sbr.rel (0) target = $region33
    $region32: #{tpu_custom_call.1} parent=1 // pred_region
      %1154 = dma.done [#allocation6], 32
    $region33: #{tpu_custom_call.1} parent=1 // pred_fallthru
      _
    %1155 = vsyncpa [#allocation5], 1
    %1156 = vsyncpa [#allocation8], 1
    %1157 = vsyncpa [#allocation6], 1

</llo_original>
